<compile_context>
chip_gen: v6e
topology: v6e:2x2x1
jax: 0.10.0
libtpu: 0.0.40
codegen_flags: <defaults>
</compile_context>

<pallas_src>
import functools

import jax
import jax.numpy as jnp
from jax.experimental import pallas as pl
from jax.experimental.pallas import tpu as pltpu

INPUT_DIM = 9
OUTPUT_DIM = 1
_GROUP = 128                      # samples packed per lane-dense row
_LANE_K = _GROUP * INPUT_DIM      # 1152 packed-row width (multiple of 128)


def _logreg_kernel(x_ref, w_ref, b_ref, o_ref):
    # x_ref: (tile_r, 1152) packed inputs; row r, lanes [9j:9j+9] hold the
    #        9 features of sample 128*r + j.
    # w_ref: (1152, 128) f32 de-interleave + contraction matrix (VMEM, resident)
    # b_ref: (1, 1) f32 bias (SMEM scalar)
    # o_ref: (tile_r, 128) f32 lane-dense outputs (sample 128*r + j at [r, j])
    z = jnp.dot(x_ref[...].astype(jnp.float32), w_ref[...],
                preferred_element_type=jnp.float32)
    z = z + b_ref[0, 0]
    # Exact sigmoid: EUP exp + f32 divide on the already lane-dense result.
    o_ref[...] = 1.0 / (1.0 + jnp.exp(-z))


def _round_up(a, m):
    return (a + m - 1) // m * m


def _build_packed_weight(weight):
    """(1, 9) Linear weight -> (1152, 128) f32 matrix W with
    W[l, j] = w[l % 9] if l // 9 == j else 0  (tiny, 576 KiB, built per call)."""
    lane = jnp.arange(_LANE_K)
    w_per_lane = weight.astype(jnp.float32).reshape(-1)[lane % INPUT_DIM]   # (1152,)
    sel = (lane // INPUT_DIM)[:, None] == jnp.arange(_GROUP)[None, :]       # (1152,128)
    return jnp.where(sel, w_per_lane[:, None], 0.0)


@functools.partial(jax.jit, static_argnames=("tile_b",))
def logistic_regression_forward(x, weight, bias, *, tile_b=65536):
    """sigmoid(x @ weight.T + bias).

    x: (B, INPUT_DIM) float32/bfloat16; weight: (OUTPUT_DIM, INPUT_DIM);
    bias: (OUTPUT_DIM,). Returns (B, OUTPUT_DIM) float32.
    tile_b = samples per grid block (65536 is VMEM-safe on v5e/v6e/v7x; sweep up
    to ~131072 on v6e/v7x for a few percent at large B).
    """
    assert x.ndim == 2 and x.shape[1] == INPUT_DIM
    assert weight.shape == (OUTPUT_DIM, INPUT_DIM)
    B = x.shape[0]

    # Accept f32/bf16 x as-is (bf16 stays narrow through the DMA, upcast
    # in-register in the kernel); do NOT add wrapper-side casts.
    if x.dtype not in (jnp.float32, jnp.bfloat16):
        x = x.astype(jnp.float32)

    # Pad only to a multiple of 128 (no-op / no copy when B already aligned).
    b_pad = _round_up(B, _GROUP)
    if b_pad != B:
        x = jnp.pad(x, ((0, b_pad - B), (0, 0)))
    R = b_pad // _GROUP

    # FREE lane-dense view: (b_pad, 9) row-major -> (R, 1152); replaces the old
    # transpose + zero-fill (which cost an extra full HBM round trip).
    x_packed = x.reshape(R, _LANE_K)

    w_big = _build_packed_weight(weight)                  # (1152, 128) f32
    b_smem = bias.astype(jnp.float32).reshape(1, 1)

    # Tile over packed rows (each row = 128 samples).
    tile_r = max(1, tile_b // _GROUP)
    if tile_r < R:
        tile_r = max(8, (tile_r // 8) * 8)                # keep (8,128) alignment
    tile_r = min(tile_r, R)                               # == R is always legal
    num_tiles = pl.cdiv(R, tile_r)
    # Give the pipeline (and both v7x TensorCores) several blocks when B allows.
    if R >= 32 and num_tiles < 4:
        tile_r = max(8, (R // 4) // 8 * 8)
        num_tiles = pl.cdiv(R, tile_r)

    itemsize = jnp.dtype(x.dtype).itemsize
    cost = pl.CostEstimate(
        flops=2 * R * _LANE_K * _GROUP + 2 * b_pad,
        transcendentals=b_pad,
        bytes_accessed=b_pad * (INPUT_DIM * itemsize + 4) + _LANE_K * _GROUP * 4,
    )

    out = pl.pallas_call(
        _logreg_kernel,
        out_shape=jax.ShapeDtypeStruct((R, _GROUP), jnp.float32),
        grid=(num_tiles,),
        in_specs=[
            pl.BlockSpec((tile_r, _LANE_K), lambda i: (i, 0)),   # packed x tiles
            pl.BlockSpec((_LANE_K, _GROUP), lambda i: (0, 0)),   # W, resident in VMEM
            pl.BlockSpec(memory_space=pltpu.MemorySpace.SMEM),   # bias scalar
        ],
        out_specs=pl.BlockSpec((tile_r, _GROUP), lambda i: (i, 0)),  # lane-dense out
        compiler_params=pltpu.CompilerParams(
            dimension_semantics=("parallel",),
        ),
        cost_estimate=cost,
        # TODO(synk): optionally sweep pipeline_mode=pl.Buffered(3) on the x spec.
    )(x_packed, w_big, b_smem)

    # (R, 128) is sample-order contiguous: reshape is a free bitcast; only slice
    # when B was padded.
    out = out.reshape(b_pad, OUTPUT_DIM)
    if b_pad != B:
        out = out[:B]
    return out


def init_params(key):
    """torch.nn.Linear default init: U(-1/sqrt(fan_in), 1/sqrt(fan_in))."""
    kw, kb = jax.random.split(key)
    bound = 1.0 / jnp.sqrt(jnp.float32(INPUT_DIM))
    weight = jax.random.uniform(
        kw, (OUTPUT_DIM, INPUT_DIM), jnp.float32, minval=-bound, maxval=bound
    )
    bias = jax.random.uniform(
        kb, (OUTPUT_DIM,), jnp.float32, minval=-bound, maxval=bound
    )
    return weight, bias


if __name__ == "__main__":
    key = jax.random.PRNGKey(0)
    kx, kx2, kp = jax.random.split(key, 3)

    weight, bias = init_params(kp)

    # Small PyTorch-shaped batch.
    batch = 8
    x = jax.random.normal(kx, (batch, INPUT_DIM), jnp.float32)
    y = jax.block_until_ready(logistic_regression_forward(x, weight, bias))
    ref = jax.nn.sigmoid(x @ weight.T + bias)
    assert y.shape == (batch, OUTPUT_DIM)
    # MXU f32 matmul may round intermediate passes -> modest tolerance.
    assert jnp.allclose(y, ref, atol=2e-3, rtol=2e-3), float(jnp.max(jnp.abs(y - ref)))

    # Non-multiple-of-128 batch exercises the pad + ragged-slice path.
    batch2 = 300
    x2 = jax.random.normal(kx2, (batch2, INPUT_DIM), jnp.float32)
    y2 = jax.block_until_ready(logistic_regression_forward(x2, weight, bias))
    ref2 = jax.nn.sigmoid(x2 @ weight.T + bias)
    assert y2.shape == (batch2, OUTPUT_DIM)
    assert jnp.allclose(y2, ref2, atol=2e-3, rtol=2e-3), float(
        jnp.max(jnp.abs(y2 - ref2))
    )

    print("KERNEL_OK")
</pallas_src>

<mosaic_0001>
module attributes {stable_mosaic.version = 11 : i64} {
  func.func @_logreg_kernel(%arg0: i32, %arg1: memref<1x1152xf32, #tpu.memory_space<vmem>>, %arg2: memref<1152x128xf32, #tpu.memory_space<vmem>>, %arg3: memref<1x1xf32, #tpu.memory_space<smem>>, %arg4: memref<1x128xf32, #tpu.memory_space<vmem>>) attributes {dimension_semantics = [#tpu.dimension_semantics<parallel>], iteration_bounds = array<i64: 1>, scalar_prefetch = 0 : i64, scratch_operands = 0 : i64, tpu.core_type = #tpu.core_type<tc>, window_params = [{transform_indices = @transform_0, window_bounds = array<i64: 1, 1152>}, {pipeline_mode = #tpu.pipeline_mode<synchronous>, transform_indices = @transform_1, window_bounds = array<i64: 1152, 128>}, {transform_indices = @transform_2, window_bounds = array<i64: 1, 1>}, {transform_indices = @transform_3, window_bounds = array<i64: 1, 128>}]} {
    %c0 = arith.constant 0 : index
    %c0_0 = arith.constant 0 : index
    %0 = vector.load %arg1[%c0, %c0_0] : memref<1x1152xf32, #tpu.memory_space<vmem>>, vector<1x1152xf32>
    %c0_1 = arith.constant 0 : index
    %c0_2 = arith.constant 0 : index
    %1 = vector.load %arg2[%c0_1, %c0_2] : memref<1152x128xf32, #tpu.memory_space<vmem>>, vector<1152x128xf32>
    %cst = arith.constant dense<0.000000e+00> : vector<1x128xf32>
    %2 = tpu.matmul %0, %1, %cst {dimension_numbers = #tpu.dot_dimension_numbers<[1], [0], [0], [1], [0, 0, 1, 1], [], []>} : vector<1x1152xf32>, vector<1152x128xf32>, vector<1x128xf32> -> vector<1x128xf32>
    %c0_3 = arith.constant 0 : index
    %c0_4 = arith.constant 0 : index
    %3 = memref.load %arg3[%c0_3, %c0_4] : memref<1x1xf32, #tpu.memory_space<smem>>
    %4 = vector.broadcast %3 : f32 to vector<1x128xf32>
    %5 = arith.addf %2, %4 : vector<1x128xf32>
    %cst_5 = arith.constant 0.000000e+00 : f32
    %6 = vector.broadcast %cst_5 : f32 to vector<1x128xf32>
    %7 = arith.subf %6, %5 : vector<1x128xf32>
    %8 = math.exp %7 : vector<1x128xf32>
    %cst_6 = arith.constant 1.000000e+00 : f32
    %9 = vector.broadcast %cst_6 : f32 to vector<1x128xf32>
    %10 = arith.addf %9, %8 : vector<1x128xf32>
    %cst_7 = arith.constant 1.000000e+00 : f32
    %11 = vector.broadcast %cst_7 : f32 to vector<1x128xf32>
    %12 = arith.divf %11, %10 : vector<1x128xf32>
    %c0_8 = arith.constant 0 : index
    %c0_9 = arith.constant 0 : index
    %13 = vector.load %arg4[%c0_8, %c0_9] : memref<1x128xf32, #tpu.memory_space<vmem>>, vector<1x128xf32>
    tpu.vector_store %arg4[%c0_8, %c0_9], %12 {strides = array<i32>} : memref<1x128xf32, #tpu.memory_space<vmem>>, vector<1x128xf32>,
    return
  }
  func.func @transform_0(%arg0: i32) -> (i32, i32) {
    %c0_i32 = arith.constant 0 : i32
    %c0_i32_0 = arith.constant 0 : i32
    return %arg0, %c0_i32 : i32, i32
  }
  func.func @transform_1(%arg0: i32) -> (i32, i32) {
    %c0_i32 = arith.constant 0 : i32
    %c0_i32_0 = arith.constant 0 : i32
    %c0_i32_1 = arith.constant 0 : i32
    return %c0_i32, %c0_i32_0 : i32, i32
  }
  func.func @transform_2(%arg0: i32) -> (i32, i32) {
    %c0_i32 = arith.constant 0 : i32
    %c0_i32_0 = arith.constant 0 : i32
    %c0_i32_1 = arith.constant 0 : i32
    return %c0_i32, %c0_i32_0 : i32, i32
  }
  func.func @transform_3(%arg0: i32) -> (i32, i32) {
    %c0_i32 = arith.constant 0 : i32
    %c0_i32_0 = arith.constant 0 : i32
    return %arg0, %c0_i32 : i32, i32
  }
}

</mosaic_0001>

<llo_original>
// kernel: logistic_regression_forward.1
$region0: #{logistic_regression_forward.1}
  #allocation0 [shape = 'u32[]', space=smem, size = 0x4, offset = 0x4, fixed_abs, tag = 'smem constant byte address 0x4 - core index']
  #allocation1 [shape = 'u32[144,128]{1,0:T(1,128)}', space=vmem, size = 0x12000, scoped, tag = 'internal scratch']
  #allocation2 [shape = 'f32[1,1]{1,0:T(1,128)S(6)}', space=smem, size = 0x200, scoped, tag = 'scoped memory for logistic_regression_forward.1']
  %s0 = inlined_call_operand.vmem [shape: f32[1,1152], index: 0, kind: input, shape index: {}]
  %s1 = inlined_call_operand.vmem [shape: f32[1152,128], index: 1, kind: input, shape index: {}]
  %s2 = inlined_call_operand.<no memory space> [shape: f32[1,1], index: 2, kind: input, shape index: {}]
  %s3 = inlined_call_operand.vmem [shape: f32[1,128], index: 3, kind: output, shape index: {}]
  %s4 = sld [smem:[#allocation0]]
  $region22: #{logistic_regression_forward.1} parent=0
    _
  %s6 = ssub.s32 1, %s4
  %s7 = scalar_select 0, %s6, %s4
  %8 = sst [smem:[#allocation2]] %s2
  // Predicated region
  $region2: #{logistic_regression_forward.1} parent=0 // pred_check
    _
  $region3: #{logistic_regression_forward.1} parent=0 // pred_check_branch
    %10 = sbr.rel (0) target = $region5
  $region4: #{logistic_regression_forward.1} parent=0 // pred_region
    _
  $region5: #{logistic_regression_forward.1} parent=0 // pred_fallthru
    _
  // Predicated region
  $region6: #{logistic_regression_forward.1} parent=0 // pred_check
    _
  $region7: #{logistic_regression_forward.1} parent=0 // pred_check_branch
    %12 = sbr.rel (0) target = $region9
  $region8: #{logistic_regression_forward.1} parent=0 // pred_region
    _
  $region9: #{logistic_regression_forward.1} parent=0 // pred_fallthru
    _
  // Predicated region
  $region10: #{logistic_regression_forward.1} parent=0 // pred_check
    _
  $region11: #{logistic_regression_forward.1} parent=0 // pred_check_branch
    %14 = sbr.rel (0) target = $region13
  $region12: #{logistic_regression_forward.1} parent=0 // pred_region
    _
  $region13: #{logistic_regression_forward.1} parent=0 // pred_fallthru
    _
  %v15 = vld [vmem:[%s0] sm:$0xff]
  %v16 = vld [vmem:[%s0 + $0x8] sm:$0x1]
  %v17 = vld [vmem:[%s1] sm:$0xff]
  %v18 = vld [vmem:[%s1 + $0x8] sm:$0xff]
  %v19 = vld [vmem:[%s1 + $0x10] sm:$0xff]
  %v20 = vld [vmem:[%s1 + $0x18] sm:$0xff]
  %v21 = vld [vmem:[%s1 + $0x20] sm:$0xff]
  %v22 = vld [vmem:[%s1 + $0x28] sm:$0xff]
  %v23 = vld [vmem:[%s1 + $0x30] sm:$0xff]
  %v24 = vld [vmem:[%s1 + $0x38] sm:$0xff]
  %v25 = vld [vmem:[%s1 + $0x40] sm:$0xff]
  %v26 = vld [vmem:[%s1 + $0x48] sm:$0xff]
  %v27 = vld [vmem:[%s1 + $0x50] sm:$0xff]
  %v28 = vld [vmem:[%s1 + $0x58] sm:$0xff]
  %v29 = vld [vmem:[%s1 + $0x60] sm:$0xff]
  %v30 = vld [vmem:[%s1 + $0x68] sm:$0xff]
  %v31 = vld [vmem:[%s1 + $0x70] sm:$0xff]
  %v32 = vld [vmem:[%s1 + $0x78] sm:$0xff]
  %v33 = vld [vmem:[%s1 + $0x80] sm:$0xff]
  %v34 = vld [vmem:[%s1 + $0x88] sm:$0xff]
  %v35 = vld [vmem:[%s1 + $0x90] sm:$0xff]
  %v36 = vld [vmem:[%s1 + $0x98] sm:$0xff]
  %v37 = vld [vmem:[%s1 + $0xa0] sm:$0xff]
  %v38 = vld [vmem:[%s1 + $0xa8] sm:$0xff]
  %v39 = vld [vmem:[%s1 + $0xb0] sm:$0xff]
  %v40 = vld [vmem:[%s1 + $0xb8] sm:$0xff]
  %v41 = vld [vmem:[%s1 + $0xc0] sm:$0xff]
  %v42 = vld [vmem:[%s1 + $0xc8] sm:$0xff]
  %v43 = vld [vmem:[%s1 + $0xd0] sm:$0xff]
  %v44 = vld [vmem:[%s1 + $0xd8] sm:$0xff]
  %v45 = vld [vmem:[%s1 + $0xe0] sm:$0xff]
  %v46 = vld [vmem:[%s1 + $0xe8] sm:$0xff]
  %v47 = vld [vmem:[%s1 + $0xf0] sm:$0xff]
  %v48 = vld [vmem:[%s1 + $0xf8] sm:$0xff]
  %v49 = vld [vmem:[%s1 + $0x100] sm:$0xff]
  %v50 = vld [vmem:[%s1 + $0x108] sm:$0xff]
  %v51 = vld [vmem:[%s1 + $0x110] sm:$0xff]
  %v52 = vld [vmem:[%s1 + $0x118] sm:$0xff]
  %v53 = vld [vmem:[%s1 + $0x120] sm:$0xff]
  %v54 = vld [vmem:[%s1 + $0x128] sm:$0xff]
  %v55 = vld [vmem:[%s1 + $0x130] sm:$0xff]
  %v56 = vld [vmem:[%s1 + $0x138] sm:$0xff]
  %v57 = vld [vmem:[%s1 + $0x140] sm:$0xff]
  %v58 = vld [vmem:[%s1 + $0x148] sm:$0xff]
  %v59 = vld [vmem:[%s1 + $0x150] sm:$0xff]
  %v60 = vld [vmem:[%s1 + $0x158] sm:$0xff]
  %v61 = vld [vmem:[%s1 + $0x160] sm:$0xff]
  %v62 = vld [vmem:[%s1 + $0x168] sm:$0xff]
  %v63 = vld [vmem:[%s1 + $0x170] sm:$0xff]
  %v64 = vld [vmem:[%s1 + $0x178] sm:$0xff]
  %v65 = vld [vmem:[%s1 + $0x180] sm:$0xff]
  %v66 = vld [vmem:[%s1 + $0x188] sm:$0xff]
  %v67 = vld [vmem:[%s1 + $0x190] sm:$0xff]
  %v68 = vld [vmem:[%s1 + $0x198] sm:$0xff]
  %v69 = vld [vmem:[%s1 + $0x1a0] sm:$0xff]
  %v70 = vld [vmem:[%s1 + $0x1a8] sm:$0xff]
  %v71 = vld [vmem:[%s1 + $0x1b0] sm:$0xff]
  %v72 = vld [vmem:[%s1 + $0x1b8] sm:$0xff]
  %v73 = vld [vmem:[%s1 + $0x1c0] sm:$0xff]
  %v74 = vld [vmem:[%s1 + $0x1c8] sm:$0xff]
  %v75 = vld [vmem:[%s1 + $0x1d0] sm:$0xff]
  %v76 = vld [vmem:[%s1 + $0x1d8] sm:$0xff]
  %v77 = vld [vmem:[%s1 + $0x1e0] sm:$0xff]
  %v78 = vld [vmem:[%s1 + $0x1e8] sm:$0xff]
  %v79 = vld [vmem:[%s1 + $0x1f0] sm:$0xff]
  %v80 = vld [vmem:[%s1 + $0x1f8] sm:$0xff]
  %v81 = vld [vmem:[%s1 + $0x200] sm:$0xff]
  %v82 = vld [vmem:[%s1 + $0x208] sm:$0xff]
  %v83 = vld [vmem:[%s1 + $0x210] sm:$0xff]
  %v84 = vld [vmem:[%s1 + $0x218] sm:$0xff]
  %v85 = vld [vmem:[%s1 + $0x220] sm:$0xff]
  %v86 = vld [vmem:[%s1 + $0x228] sm:$0xff]
  %v87 = vld [vmem:[%s1 + $0x230] sm:$0xff]
  %v88 = vld [vmem:[%s1 + $0x238] sm:$0xff]
  %v89 = vld [vmem:[%s1 + $0x240] sm:$0xff]
  %v90 = vld [vmem:[%s1 + $0x248] sm:$0xff]
  %v91 = vld [vmem:[%s1 + $0x250] sm:$0xff]
  %v92 = vld [vmem:[%s1 + $0x258] sm:$0xff]
  %v93 = vld [vmem:[%s1 + $0x260] sm:$0xff]
  %v94 = vld [vmem:[%s1 + $0x268] sm:$0xff]
  %v95 = vld [vmem:[%s1 + $0x270] sm:$0xff]
  %v96 = vld [vmem:[%s1 + $0x278] sm:$0xff]
  %v97 = vld [vmem:[%s1 + $0x280] sm:$0xff]
  %v98 = vld [vmem:[%s1 + $0x288] sm:$0xff]
  %v99 = vld [vmem:[%s1 + $0x290] sm:$0xff]
  %v100 = vld [vmem:[%s1 + $0x298] sm:$0xff]
  %v101 = vld [vmem:[%s1 + $0x2a0] sm:$0xff]
  %v102 = vld [vmem:[%s1 + $0x2a8] sm:$0xff]
  %v103 = vld [vmem:[%s1 + $0x2b0] sm:$0xff]
  %v104 = vld [vmem:[%s1 + $0x2b8] sm:$0xff]
  %v105 = vld [vmem:[%s1 + $0x2c0] sm:$0xff]
  %v106 = vld [vmem:[%s1 + $0x2c8] sm:$0xff]
  %v107 = vld [vmem:[%s1 + $0x2d0] sm:$0xff]
  %v108 = vld [vmem:[%s1 + $0x2d8] sm:$0xff]
  %v109 = vld [vmem:[%s1 + $0x2e0] sm:$0xff]
  %v110 = vld [vmem:[%s1 + $0x2e8] sm:$0xff]
  %v111 = vld [vmem:[%s1 + $0x2f0] sm:$0xff]
  %v112 = vld [vmem:[%s1 + $0x2f8] sm:$0xff]
  %v113 = vld [vmem:[%s1 + $0x300] sm:$0xff]
  %v114 = vld [vmem:[%s1 + $0x308] sm:$0xff]
  %v115 = vld [vmem:[%s1 + $0x310] sm:$0xff]
  %v116 = vld [vmem:[%s1 + $0x318] sm:$0xff]
  %v117 = vld [vmem:[%s1 + $0x320] sm:$0xff]
  %v118 = vld [vmem:[%s1 + $0x328] sm:$0xff]
  %v119 = vld [vmem:[%s1 + $0x330] sm:$0xff]
  %v120 = vld [vmem:[%s1 + $0x338] sm:$0xff]
  %v121 = vld [vmem:[%s1 + $0x340] sm:$0xff]
  %v122 = vld [vmem:[%s1 + $0x348] sm:$0xff]
  %v123 = vld [vmem:[%s1 + $0x350] sm:$0xff]
  %v124 = vld [vmem:[%s1 + $0x358] sm:$0xff]
  %v125 = vld [vmem:[%s1 + $0x360] sm:$0xff]
  %v126 = vld [vmem:[%s1 + $0x368] sm:$0xff]
  %v127 = vld [vmem:[%s1 + $0x370] sm:$0xff]
  %v128 = vld [vmem:[%s1 + $0x378] sm:$0xff]
  %v129 = vld [vmem:[%s1 + $0x380] sm:$0xff]
  %v130 = vld [vmem:[%s1 + $0x388] sm:$0xff]
  %v131 = vld [vmem:[%s1 + $0x390] sm:$0xff]
  %v132 = vld [vmem:[%s1 + $0x398] sm:$0xff]
  %v133 = vld [vmem:[%s1 + $0x3a0] sm:$0xff]
  %v134 = vld [vmem:[%s1 + $0x3a8] sm:$0xff]
  %v135 = vld [vmem:[%s1 + $0x3b0] sm:$0xff]
  %v136 = vld [vmem:[%s1 + $0x3b8] sm:$0xff]
  %v137 = vld [vmem:[%s1 + $0x3c0] sm:$0xff]
  %v138 = vld [vmem:[%s1 + $0x3c8] sm:$0xff]
  %v139 = vld [vmem:[%s1 + $0x3d0] sm:$0xff]
  %v140 = vld [vmem:[%s1 + $0x3d8] sm:$0xff]
  %v141 = vld [vmem:[%s1 + $0x3e0] sm:$0xff]
  %v142 = vld [vmem:[%s1 + $0x3e8] sm:$0xff]
  %v143 = vld [vmem:[%s1 + $0x3f0] sm:$0xff]
  %v144 = vld [vmem:[%s1 + $0x3f8] sm:$0xff]
  %v145 = vld [vmem:[%s1 + $0x400] sm:$0xff]
  %v146 = vld [vmem:[%s1 + $0x408] sm:$0xff]
  %v147 = vld [vmem:[%s1 + $0x410] sm:$0xff]
  %v148 = vld [vmem:[%s1 + $0x418] sm:$0xff]
  %v149 = vld [vmem:[%s1 + $0x420] sm:$0xff]
  %v150 = vld [vmem:[%s1 + $0x428] sm:$0xff]
  %v151 = vld [vmem:[%s1 + $0x430] sm:$0xff]
  %v152 = vld [vmem:[%s1 + $0x438] sm:$0xff]
  %v153 = vld [vmem:[%s1 + $0x440] sm:$0xff]
  %v154 = vld [vmem:[%s1 + $0x448] sm:$0xff]
  %v155 = vld [vmem:[%s1 + $0x450] sm:$0xff]
  %v156 = vld [vmem:[%s1 + $0x458] sm:$0xff]
  %v157 = vld [vmem:[%s1 + $0x460] sm:$0xff]
  %v158 = vld [vmem:[%s1 + $0x468] sm:$0xff]
  %v159 = vld [vmem:[%s1 + $0x470] sm:$0xff]
  %v160 = vld [vmem:[%s1 + $0x478] sm:$0xff]
  %s161 = sld [smem:[#allocation2]]
  %v162 = vstv %s161
  %v165 = vlaneseq
  %v166 = vshrl.u32 %v165, 7
  %v167 = vsub.s32 0, %v166
  %v168 = vrot.slane %v15, %v167
  %v169 = vlaneseq
  %v170 = vshrl.u32 %v169, 7
  %v171 = vsub.s32 1, %v170
  %v172 = vrot.slane %v15, %v171
  %v173 = vlaneseq
  %v174 = vshrl.u32 %v173, 7
  %v175 = vsub.s32 2, %v174
  %v176 = vrot.slane %v15, %v175
  %v177 = vlaneseq
  %v178 = vshrl.u32 %v177, 7
  %v179 = vsub.s32 3, %v178
  %v180 = vrot.slane %v15, %v179
  %v181 = vlaneseq
  %v182 = vshrl.u32 %v181, 7
  %v183 = vsub.s32 4, %v182
  %v184 = vrot.slane %v15, %v183
  %v185 = vlaneseq
  %v186 = vshrl.u32 %v185, 7
  %v187 = vsub.s32 5, %v186
  %v188 = vrot.slane %v15, %v187
  %v189 = vlaneseq
  %v190 = vshrl.u32 %v189, 7
  %v191 = vsub.s32 6, %v190
  %v192 = vrot.slane %v15, %v191
  %v193 = vlaneseq
  %v194 = vshrl.u32 %v193, 7
  %v195 = vsub.s32 7, %v194
  %v196 = vrot.slane %v15, %v195
  %v197 = vlaneseq
  %v198 = vshrl.u32 %v197, 7
  %v199 = vsub.s32 0, %v198
  %v200 = vrot.slane %v16, %v199
  %210 = vmatprep.subr.mxu0 0.0
  %211 = vmatpush1.msra.mxu0 %v32
  %212 = vmatprep.subr.mxu0 0.0
  %213 = vmatpush1.msra.mxu0 %v31
  %214 = vmatprep.subr.mxu0 0.0
  %215 = vmatpush1.msra.mxu0 %v30
  %216 = vmatprep.subr.mxu0 0.0
  %217 = vmatpush1.msra.mxu0 %v29
  %218 = vmatprep.subr.mxu0 0.0
  %219 = vmatpush1.msra.mxu0 %v28
  %220 = vmatprep.subr.mxu0 0.0
  %221 = vmatpush1.msra.mxu0 %v27
  %222 = vmatprep.subr.mxu0 0.0
  %223 = vmatpush1.msra.mxu0 %v26
  %224 = vmatprep.subr.mxu0 0.0
  %225 = vmatpush1.msra.mxu0 %v25
  %226 = vmatprep.subr.mxu0 0.0
  %227 = vmatpush1.msra.mxu0 %v24
  %228 = vmatprep.subr.mxu0 0.0
  %229 = vmatpush1.msra.mxu0 %v23
  %230 = vmatprep.subr.mxu0 0.0
  %231 = vmatpush1.msra.mxu0 %v22
  %232 = vmatprep.subr.mxu0 0.0
  %233 = vmatpush1.msra.mxu0 %v21
  %234 = vmatprep.subr.mxu0 0.0
  %235 = vmatpush1.msra.mxu0 %v20
  %236 = vmatprep.subr.mxu0 0.0
  %237 = vmatpush1.msra.mxu0 %v19
  %238 = vmatprep.subr.mxu0 0.0
  %239 = vmatpush1.msra.mxu0 %v18
  %240 = vmatprep.subr.mxu0 0.0
  %241 = vmatpush1.msra.mxu0 %v17
  %242 = vmatprep.subr.mxu0 0.0
  %243 = vmatpush2.msra.mxu0 %v48
  %244 = vmatprep.subr.mxu0 0.0
  %245 = vmatpush2.msra.mxu0 %v47
  %246 = vmatprep.subr.mxu0 0.0
  %247 = vmatpush2.msra.mxu0 %v46
  %248 = vmatprep.subr.mxu0 0.0
  %249 = vmatpush2.msra.mxu0 %v45
  %250 = vmatprep.subr.mxu0 0.0
  %251 = vmatpush2.msra.mxu0 %v44
  %252 = vmatprep.subr.mxu0 0.0
  %253 = vmatpush2.msra.mxu0 %v43
  %254 = vmatprep.subr.mxu0 0.0
  %255 = vmatpush2.msra.mxu0 %v42
  %256 = vmatprep.subr.mxu0 0.0
  %257 = vmatpush2.msra.mxu0 %v41
  %258 = vmatprep.subr.mxu0 0.0
  %259 = vmatpush2.msra.mxu0 %v40
  %260 = vmatprep.subr.mxu0 0.0
  %261 = vmatpush2.msra.mxu0 %v39
  %262 = vmatprep.subr.mxu0 0.0
  %263 = vmatpush2.msra.mxu0 %v38
  %264 = vmatprep.subr.mxu0 0.0
  %265 = vmatpush2.msra.mxu0 %v37
  %266 = vmatprep.subr.mxu0 0.0
  %267 = vmatpush2.msra.mxu0 %v36
  %268 = vmatprep.subr.mxu0 0.0
  %269 = vmatpush2.msra.mxu0 %v35
  %270 = vmatprep.subr.mxu0 0.0
  %271 = vmatpush2.msra.mxu0 %v34
  %272 = vmatprep.subr.mxu0 0.0
  %273 = vmatpush2.msra.mxu0 %v33
  %274 = vmatprep.mubr.f32.mxu0 %v172
  %275 = vmatmul.mubr.f32.gmra.mxu0 %v168
  %v276 = vpop.f32.mrf.mxu0
  %v277 = vadd.f32 %v162, %v276
  %v278 = vpop.f32.mrf.mxu0
  %279 = vdwg.mxu0
  %280 = vmatprep.subr.mxu0 0.0
  %281 = vmatpush1.msra.mxu0 %v64
  %282 = vmatprep.subr.mxu0 0.0
  %283 = vmatpush1.msra.mxu0 %v63
  %284 = vmatprep.subr.mxu0 0.0
  %285 = vmatpush1.msra.mxu0 %v62
  %286 = vmatprep.subr.mxu0 0.0
  %287 = vmatpush1.msra.mxu0 %v61
  %288 = vmatprep.subr.mxu0 0.0
  %289 = vmatpush1.msra.mxu0 %v60
  %290 = vmatprep.subr.mxu0 0.0
  %291 = vmatpush1.msra.mxu0 %v59
  %292 = vmatprep.subr.mxu0 0.0
  %293 = vmatpush1.msra.mxu0 %v58
  %294 = vmatprep.subr.mxu0 0.0
  %295 = vmatpush1.msra.mxu0 %v57
  %296 = vmatprep.subr.mxu0 0.0
  %297 = vmatpush1.msra.mxu0 %v56
  %298 = vmatprep.subr.mxu0 0.0
  %299 = vmatpush1.msra.mxu0 %v55
  %300 = vmatprep.subr.mxu0 0.0
  %301 = vmatpush1.msra.mxu0 %v54
  %302 = vmatprep.subr.mxu0 0.0
  %303 = vmatpush1.msra.mxu0 %v53
  %304 = vmatprep.subr.mxu0 0.0
  %305 = vmatpush1.msra.mxu0 %v52
  %306 = vmatprep.subr.mxu0 0.0
  %307 = vmatpush1.msra.mxu0 %v51
  %308 = vmatprep.subr.mxu0 0.0
  %309 = vmatpush1.msra.mxu0 %v50
  %310 = vmatprep.subr.mxu0 0.0
  %311 = vmatpush1.msra.mxu0 %v49
  %312 = vmatprep.subr.mxu0 0.0
  %313 = vmatpush2.msra.mxu0 %v80
  %314 = vmatprep.subr.mxu0 0.0
  %315 = vmatpush2.msra.mxu0 %v79
  %316 = vmatprep.subr.mxu0 0.0
  %317 = vmatpush2.msra.mxu0 %v78
  %318 = vmatprep.subr.mxu0 0.0
  %319 = vmatpush2.msra.mxu0 %v77
  %320 = vmatprep.subr.mxu0 0.0
  %321 = vmatpush2.msra.mxu0 %v76
  %322 = vmatprep.subr.mxu0 0.0
  %323 = vmatpush2.msra.mxu0 %v75
  %324 = vmatprep.subr.mxu0 0.0
  %325 = vmatpush2.msra.mxu0 %v74
  %326 = vmatprep.subr.mxu0 0.0
  %327 = vmatpush2.msra.mxu0 %v73
  %328 = vmatprep.subr.mxu0 0.0
  %329 = vmatpush2.msra.mxu0 %v72
  %330 = vmatprep.subr.mxu0 0.0
  %331 = vmatpush2.msra.mxu0 %v71
  %332 = vmatprep.subr.mxu0 0.0
  %333 = vmatpush2.msra.mxu0 %v70
  %334 = vmatprep.subr.mxu0 0.0
  %335 = vmatpush2.msra.mxu0 %v69
  %336 = vmatprep.subr.mxu0 0.0
  %337 = vmatpush2.msra.mxu0 %v68
  %338 = vmatprep.subr.mxu0 0.0
  %339 = vmatpush2.msra.mxu0 %v67
  %340 = vmatprep.subr.mxu0 0.0
  %341 = vmatpush2.msra.mxu0 %v66
  %342 = vmatprep.subr.mxu0 0.0
  %343 = vmatpush2.msra.mxu0 %v65
  %344 = vmatprep.mubr.f32.mxu0 %v180
  %345 = vmatmul.mubr.f32.gmra.mxu0 %v176
  %v346 = vpop.f32.mrf.mxu0
  %v347 = vadd.f32 %v277, %v346
  %v348 = vpop.f32.mrf.mxu0
  %349 = vdwg.mxu0
  %350 = vmatprep.subr.mxu0 0.0
  %351 = vmatpush1.msra.mxu0 %v96
  %352 = vmatprep.subr.mxu0 0.0
  %353 = vmatpush1.msra.mxu0 %v95
  %354 = vmatprep.subr.mxu0 0.0
  %355 = vmatpush1.msra.mxu0 %v94
  %356 = vmatprep.subr.mxu0 0.0
  %357 = vmatpush1.msra.mxu0 %v93
  %358 = vmatprep.subr.mxu0 0.0
  %359 = vmatpush1.msra.mxu0 %v92
  %360 = vmatprep.subr.mxu0 0.0
  %361 = vmatpush1.msra.mxu0 %v91
  %362 = vmatprep.subr.mxu0 0.0
  %363 = vmatpush1.msra.mxu0 %v90
  %364 = vmatprep.subr.mxu0 0.0
  %365 = vmatpush1.msra.mxu0 %v89
  %366 = vmatprep.subr.mxu0 0.0
  %367 = vmatpush1.msra.mxu0 %v88
  %368 = vmatprep.subr.mxu0 0.0
  %369 = vmatpush1.msra.mxu0 %v87
  %370 = vmatprep.subr.mxu0 0.0
  %371 = vmatpush1.msra.mxu0 %v86
  %372 = vmatprep.subr.mxu0 0.0
  %373 = vmatpush1.msra.mxu0 %v85
  %374 = vmatprep.subr.mxu0 0.0
  %375 = vmatpush1.msra.mxu0 %v84
  %376 = vmatprep.subr.mxu0 0.0
  %377 = vmatpush1.msra.mxu0 %v83
  %378 = vmatprep.subr.mxu0 0.0
  %379 = vmatpush1.msra.mxu0 %v82
  %380 = vmatprep.subr.mxu0 0.0
  %381 = vmatpush1.msra.mxu0 %v81
  %382 = vmatprep.subr.mxu0 0.0
  %383 = vmatpush2.msra.mxu0 %v112
  %384 = vmatprep.subr.mxu0 0.0
  %385 = vmatpush2.msra.mxu0 %v111
  %386 = vmatprep.subr.mxu0 0.0
  %387 = vmatpush2.msra.mxu0 %v110
  %388 = vmatprep.subr.mxu0 0.0
  %389 = vmatpush2.msra.mxu0 %v109
  %390 = vmatprep.subr.mxu0 0.0
  %391 = vmatpush2.msra.mxu0 %v108
  %392 = vmatprep.subr.mxu0 0.0
  %393 = vmatpush2.msra.mxu0 %v107
  %394 = vmatprep.subr.mxu0 0.0
  %395 = vmatpush2.msra.mxu0 %v106
  %396 = vmatprep.subr.mxu0 0.0
  %397 = vmatpush2.msra.mxu0 %v105
  %398 = vmatprep.subr.mxu0 0.0
  %399 = vmatpush2.msra.mxu0 %v104
  %400 = vmatprep.subr.mxu0 0.0
  %401 = vmatpush2.msra.mxu0 %v103
  %402 = vmatprep.subr.mxu0 0.0
  %403 = vmatpush2.msra.mxu0 %v102
  %404 = vmatprep.subr.mxu0 0.0
  %405 = vmatpush2.msra.mxu0 %v101
  %406 = vmatprep.subr.mxu0 0.0
  %407 = vmatpush2.msra.mxu0 %v100
  %408 = vmatprep.subr.mxu0 0.0
  %409 = vmatpush2.msra.mxu0 %v99
  %410 = vmatprep.subr.mxu0 0.0
  %411 = vmatpush2.msra.mxu0 %v98
  %412 = vmatprep.subr.mxu0 0.0
  %413 = vmatpush2.msra.mxu0 %v97
  %414 = vmatprep.mubr.f32.mxu0 %v188
  %415 = vmatmul.mubr.f32.gmra.mxu0 %v184
  %v416 = vpop.f32.mrf.mxu0
  %v417 = vadd.f32 %v347, %v416
  %v418 = vpop.f32.mrf.mxu0
  %419 = vdwg.mxu0
  %420 = vmatprep.subr.mxu0 0.0
  %421 = vmatpush1.msra.mxu0 %v128
  %422 = vmatprep.subr.mxu0 0.0
  %423 = vmatpush1.msra.mxu0 %v127
  %424 = vmatprep.subr.mxu0 0.0
  %425 = vmatpush1.msra.mxu0 %v126
  %426 = vmatprep.subr.mxu0 0.0
  %427 = vmatpush1.msra.mxu0 %v125
  %428 = vmatprep.subr.mxu0 0.0
  %429 = vmatpush1.msra.mxu0 %v124
  %430 = vmatprep.subr.mxu0 0.0
  %431 = vmatpush1.msra.mxu0 %v123
  %432 = vmatprep.subr.mxu0 0.0
  %433 = vmatpush1.msra.mxu0 %v122
  %434 = vmatprep.subr.mxu0 0.0
  %435 = vmatpush1.msra.mxu0 %v121
  %436 = vmatprep.subr.mxu0 0.0
  %437 = vmatpush1.msra.mxu0 %v120
  %438 = vmatprep.subr.mxu0 0.0
  %439 = vmatpush1.msra.mxu0 %v119
  %440 = vmatprep.subr.mxu0 0.0
  %441 = vmatpush1.msra.mxu0 %v118
  %442 = vmatprep.subr.mxu0 0.0
  %443 = vmatpush1.msra.mxu0 %v117
  %444 = vmatprep.subr.mxu0 0.0
  %445 = vmatpush1.msra.mxu0 %v116
  %446 = vmatprep.subr.mxu0 0.0
  %447 = vmatpush1.msra.mxu0 %v115
  %448 = vmatprep.subr.mxu0 0.0
  %449 = vmatpush1.msra.mxu0 %v114
  %450 = vmatprep.subr.mxu0 0.0
  %451 = vmatpush1.msra.mxu0 %v113
  %452 = vmatprep.subr.mxu0 0.0
  %453 = vmatpush2.msra.mxu0 %v144
  %454 = vmatprep.subr.mxu0 0.0
  %455 = vmatpush2.msra.mxu0 %v143
  %456 = vmatprep.subr.mxu0 0.0
  %457 = vmatpush2.msra.mxu0 %v142
  %458 = vmatprep.subr.mxu0 0.0
  %459 = vmatpush2.msra.mxu0 %v141
  %460 = vmatprep.subr.mxu0 0.0
  %461 = vmatpush2.msra.mxu0 %v140
  %462 = vmatprep.subr.mxu0 0.0
  %463 = vmatpush2.msra.mxu0 %v139
  %464 = vmatprep.subr.mxu0 0.0
  %465 = vmatpush2.msra.mxu0 %v138
  %466 = vmatprep.subr.mxu0 0.0
  %467 = vmatpush2.msra.mxu0 %v137
  %468 = vmatprep.subr.mxu0 0.0
  %469 = vmatpush2.msra.mxu0 %v136
  %470 = vmatprep.subr.mxu0 0.0
  %471 = vmatpush2.msra.mxu0 %v135
  %472 = vmatprep.subr.mxu0 0.0
  %473 = vmatpush2.msra.mxu0 %v134
  %474 = vmatprep.subr.mxu0 0.0
  %475 = vmatpush2.msra.mxu0 %v133
  %476 = vmatprep.subr.mxu0 0.0
  %477 = vmatpush2.msra.mxu0 %v132
  %478 = vmatprep.subr.mxu0 0.0
  %479 = vmatpush2.msra.mxu0 %v131
  %480 = vmatprep.subr.mxu0 0.0
  %481 = vmatpush2.msra.mxu0 %v130
  %482 = vmatprep.subr.mxu0 0.0
  %483 = vmatpush2.msra.mxu0 %v129
  %484 = vmatprep.mubr.f32.mxu0 %v196
  %485 = vmatmul.mubr.f32.gmra.mxu0 %v192
  %v486 = vpop.f32.mrf.mxu0
  %v487 = vadd.f32 %v417, %v486
  %v488 = vpop.f32.mrf.mxu0
  %489 = vdwg.mxu0
  %490 = vmatprep.subr.mxu0 0.0
  %491 = vmatpush1.msra.mxu0 %v160
  %492 = vmatprep.subr.mxu0 0.0
  %493 = vmatpush1.msra.mxu0 %v159
  %494 = vmatprep.subr.mxu0 0.0
  %495 = vmatpush1.msra.mxu0 %v158
  %496 = vmatprep.subr.mxu0 0.0
  %497 = vmatpush1.msra.mxu0 %v157
  %498 = vmatprep.subr.mxu0 0.0
  %499 = vmatpush1.msra.mxu0 %v156
  %500 = vmatprep.subr.mxu0 0.0
  %501 = vmatpush1.msra.mxu0 %v155
  %502 = vmatprep.subr.mxu0 0.0
  %503 = vmatpush1.msra.mxu0 %v154
  %504 = vmatprep.subr.mxu0 0.0
  %505 = vmatpush1.msra.mxu0 %v153
  %506 = vmatprep.subr.mxu0 0.0
  %507 = vmatpush1.msra.mxu0 %v152
  %508 = vmatprep.subr.mxu0 0.0
  %509 = vmatpush1.msra.mxu0 %v151
  %510 = vmatprep.subr.mxu0 0.0
  %511 = vmatpush1.msra.mxu0 %v150
  %512 = vmatprep.subr.mxu0 0.0
  %513 = vmatpush1.msra.mxu0 %v149
  %514 = vmatprep.subr.mxu0 0.0
  %515 = vmatpush1.msra.mxu0 %v148
  %516 = vmatprep.subr.mxu0 0.0
  %517 = vmatpush1.msra.mxu0 %v147
  %518 = vmatprep.subr.mxu0 0.0
  %519 = vmatpush1.msra.mxu0 %v146
  %520 = vmatprep.subr.mxu0 0.0
  %521 = vmatpush1.msra.mxu0 %v145
  %522 = vmatprep.subr.mxu0 0.0
  %523 = vmatpush2.msra.mxu0 0.0
  %524 = vmatprep.subr.mxu0 0.0
  %525 = vmatpush2.msra.mxu0 0.0
  %526 = vmatprep.subr.mxu0 0.0
  %527 = vmatpush2.msra.mxu0 0.0
  %528 = vmatprep.subr.mxu0 0.0
  %529 = vmatpush2.msra.mxu0 0.0
  %530 = vmatprep.subr.mxu0 0.0
  %531 = vmatpush2.msra.mxu0 0.0
  %532 = vmatprep.subr.mxu0 0.0
  %533 = vmatpush2.msra.mxu0 0.0
  %534 = vmatprep.subr.mxu0 0.0
  %535 = vmatpush2.msra.mxu0 0.0
  %536 = vmatprep.subr.mxu0 0.0
  %537 = vmatpush2.msra.mxu0 0.0
  %538 = vmatprep.subr.mxu0 0.0
  %539 = vmatpush2.msra.mxu0 0.0
  %540 = vmatprep.subr.mxu0 0.0
  %541 = vmatpush2.msra.mxu0 0.0
  %542 = vmatprep.subr.mxu0 0.0
  %543 = vmatpush2.msra.mxu0 0.0
  %544 = vmatprep.subr.mxu0 0.0
  %545 = vmatpush2.msra.mxu0 0.0
  %546 = vmatprep.subr.mxu0 0.0
  %547 = vmatpush2.msra.mxu0 0.0
  %548 = vmatprep.subr.mxu0 0.0
  %549 = vmatpush2.msra.mxu0 0.0
  %550 = vmatprep.subr.mxu0 0.0
  %551 = vmatpush2.msra.mxu0 0.0
  %552 = vmatprep.subr.mxu0 0.0
  %553 = vmatpush2.msra.mxu0 0.0
  %554 = vmatprep.mubr.f32.mxu0 0.0
  %555 = vmatmul.mubr.f32.gmra.mxu0 %v200
  %v556 = vpop.f32.mrf.mxu0
  %v557 = vadd.f32 %v487, %v556
  %v558 = vpop.f32.mrf.mxu0
  %559 = vdwg.mxu0
  %v560 = vsub.f32 0.0, %v557
  %v561 = vmul.f32 %v560, 1.442695
  %v562 = vpow.pop %v561
  %v563 = vadd.f32 %v562, 1.0
  %v564 = vrcp.pop %v563
  %v565 = vmul.f32 1.0, %v564
  %566 = vst [vmem:[%s3] sm:$0x1] %v565
  // Predicated region
  $region14: #{logistic_regression_forward.1} parent=0 // pred_check
    _
  $region15: #{logistic_regression_forward.1} parent=0 // pred_check_branch
    %568 = sbr.rel (0) target = $region17
  $region16: #{logistic_regression_forward.1} parent=0 // pred_region
    _
  $region17: #{logistic_regression_forward.1} parent=0 // pred_fallthru
    _
  // Predicated region
  $region18: #{logistic_regression_forward.1} parent=0 // pred_check
    _
  $region19: #{logistic_regression_forward.1} parent=0 // pred_check_branch
    %570 = sbr.rel (0) target = $region21
  $region20: #{logistic_regression_forward.1} parent=0 // pred_region
    _
  $region21: #{logistic_regression_forward.1} parent=0 // pred_fallthru
    _

</llo_original>
